<compile_context>
chip_gen: v7x
topology: tpu7x:2x2x1
jax: 0.10.0
libtpu: 0.0.40
codegen_flags: <defaults>
</compile_context>

<pallas_src>
import functools

import jax
import jax.numpy as jnp
from jax.experimental import pallas as pl
from jax.experimental.pallas import tpu as pltpu


_NUM_CORES = 2          # leading 'parallel' grid axis (both TCs on v7x)
_TB_CAP = 64 * 1024     # max batch-tile width in columns (~10 MiB VMEM footprint)
_LANES = 128


def _round_up(x, m):
    return (x + m - 1) // m * m


def _cdiv(a, b):
    return (a + b - 1) // b


def _focal_loss_kernel(x_ref, t_ref, a_ref, out_ref, acc_ref, *,
                       gamma, reduction, batch, num_classes):
    i = pl.program_id(1)                        # reduction (batch-tile) axis

    @pl.when(i == 0)
    def _():
        acc_ref[...] = jnp.zeros_like(acc_ref)

    x = x_ref[...].astype(jnp.float32)          # (C, TB) logits, batch on lanes
    t = t_ref[...]                              # (1, TB) int32 labels (C == padding)
    alpha = a_ref[...].astype(jnp.float32)      # (C, 1)  per-class alpha

    C = x.shape[0]

    # One-hot as a boolean mask: (C,1) sublane iota broadcast against label row.
    class_ids = jax.lax.broadcasted_iota(jnp.int32, (C, 1), 0)
    is_target = class_ids == t                  # (C, TB) bool

    # Numerically-stable BCE with logits (torch formulation):
    #   bce = max(x, 0) - x*y + log1p(exp(-|x|))
    e = jnp.exp(-jnp.abs(x))                    # single exp, reused below
    bce = jnp.maximum(x, 0.0) - jnp.where(is_target, x, 0.0) + jnp.log1p(e)

    # pt = exp(-bce), rewritten via sigmoid to reuse `e` (no extra exp):
    #   p = sigmoid(x) = where(x>=0, 1, e) / (1 + e);  pt = y ? p : (1 - p)
    inv = 1.0 / (1.0 + e)
    p = jnp.where(x >= 0.0, 1.0, e) * inv
    pt = jnp.where(is_target, p, 1.0 - p)

    # Focal weight: integer gamma -> repeated VPU multiplies (no pow / extra EUP).
    w = 1.0 - pt
    if float(gamma).is_integer() and 0 <= int(gamma) <= 8:
        focal = jnp.ones_like(w)
        for _ in range(int(gamma)):
            focal = focal * w
    else:
        focal = w ** jnp.float32(gamma)         # fallback for non-integer gamma

    # alpha[targets] via masked sublane (XLU) reduce; padded labels (=C) match
    # no class, so padded columns contribute exactly zero -- no validity mask.
    alpha_b = jnp.sum(jnp.where(is_target, alpha, 0.0), axis=0, keepdims=True)

    # Reduce over classes first, then a single alpha multiply per column.
    col_loss = alpha_b * jnp.sum(focal * bce, axis=0, keepdims=True)   # (1, TB)

    # Per-lane VMEM accumulator; the expensive cross-lane reduce happens once.
    acc_ref[...] += col_loss

    @pl.when(i == pl.num_programs(1) - 1)
    def _():
        partial = jnp.sum(acc_ref[...])
        if reduction != 'sum':                  # 'mean' and anything else -> mean
            partial = partial / jnp.float32(batch * num_classes)
        out_ref[...] = jnp.broadcast_to(partial, out_ref.shape)


def focal_loss_with_bce(inputs, targets, alpha, *, gamma=2, reduction='mean',
                        edge_num_classes=5):
    """Layout plumbing in plain JAX; all hot-path compute in the kernel."""
    B, C = inputs.shape
    assert C == edge_num_classes, "inputs' class dim must equal edge_num_classes"

    # Lane-dense layout: batch on the minor (lane) axis.  Choose the number of
    # batch tiles so each tile moves >~1 MB (amortizes per-step overhead) while
    # staying within a v7x-safe VMEM budget, then split tiles evenly across the
    # leading 'parallel' (core) axis.  Explicit padding keeps all block reads
    # in-bounds and finite.
    B128 = _round_up(max(B, 1), _LANES)
    n_tiles = _round_up(_cdiv(B128, _TB_CAP), _NUM_CORES)
    TB = _round_up(_cdiv(B128, n_tiles), _LANES)
    B_pad = n_tiles * TB
    n_per_core = n_tiles // _NUM_CORES

    # TODO(synk): produce logits upstream in (C, B) layout to avoid this extra
    # transpose/pad pass over HBM (a full read+write of the largest array).
    x = jnp.zeros((C, B_pad), inputs.dtype).at[:, :B].set(inputs.T)
    # Padded columns carry the out-of-range label C -> exactly zero contribution.
    # TODO(synk): ship targets as int8 (C < 127) to shrink this HBM stream ~4x
    # on memory-bound v5e/v6e.
    t = jnp.full((1, B_pad), C, dtype=jnp.int32).at[:, :B].set(
        targets.astype(jnp.int32)[None, :])
    a = jnp.asarray(alpha, dtype=jnp.float32).reshape(C, 1)

    kernel = functools.partial(
        _focal_loss_kernel, gamma=gamma, reduction=reduction,
        batch=B, num_classes=C)

    out = pl.pallas_call(
        kernel,
        out_shape=jax.ShapeDtypeStruct((1, _NUM_CORES * _LANES), jnp.float32),
        grid=(_NUM_CORES, n_per_core),
        in_specs=[
            pl.BlockSpec((C, TB), lambda c, i: (0, c * n_per_core + i)),  # logits
            pl.BlockSpec((1, TB), lambda c, i: (0, c * n_per_core + i)),  # labels
            pl.BlockSpec((C, 1), lambda c, i: (0, 0)),                    # alpha
        ],
        out_specs=pl.BlockSpec((1, _LANES), lambda c, i: (0, c)),  # per-core slab
        scratch_shapes=[pltpu.VMEM((1, TB), jnp.float32)],         # lane accumulator
        compiler_params=pltpu.CompilerParams(
            dimension_semantics=("parallel", "arbitrary"),
            vmem_limit_bytes=32 * 1024 * 1024),
    )(x, t, a)

    # One finished partial per core (broadcast across its 128-lane block).
    partials = out.reshape(_NUM_CORES, _LANES)[:, 0]
    return jnp.sum(partials)


def _reference(inputs, targets, alpha, gamma=2, reduction='mean'):
    """Pure-JAX reference mirroring the PyTorch module exactly."""
    C = inputs.shape[1]
    one_hot = jax.nn.one_hot(targets, C, dtype=jnp.float32)
    x = inputs.astype(jnp.float32)
    bce = jnp.maximum(x, 0.0) - x * one_hot + jnp.log1p(jnp.exp(-jnp.abs(x)))
    alpha_f = alpha[targets][:, None]
    pt = jnp.exp(-bce)
    loss = alpha_f * (1.0 - pt) ** gamma * bce
    return loss.sum() if reduction == 'sum' else loss.mean()


if __name__ == "__main__":
    B = 8                 # batch_size
    C = 5                 # edge_num_classes
    GAMMA = 2

    key = jax.random.PRNGKey(0)
    k_x, k_t = jax.random.split(key)

    inputs = jax.random.normal(k_x, (B, C), dtype=jnp.float32)       # logits [B, C]
    targets = jax.random.randint(k_t, (B,), 0, C, dtype=jnp.int32)   # labels [B]
    alpha = jnp.array([0.25, 0.5, 0.75, 1.0, 1.25], dtype=jnp.float32)

    out = focal_loss_with_bce(inputs, targets, alpha, gamma=GAMMA,
                              reduction='mean', edge_num_classes=C)
    out = jax.block_until_ready(out)

    ref = _reference(inputs, targets, alpha, gamma=GAMMA, reduction='mean')
    assert jnp.allclose(out, ref, rtol=1e-4, atol=1e-5), (out, ref)

    # Also sanity-check 'sum' reduction path.
    out_s = jax.block_until_ready(
        focal_loss_with_bce(inputs, targets, alpha, gamma=GAMMA,
                            reduction='sum', edge_num_classes=C))
    ref_s = _reference(inputs, targets, alpha, gamma=GAMMA, reduction='sum')
    assert jnp.allclose(out_s, ref_s, rtol=1e-4, atol=1e-5), (out_s, ref_s)

    print("KERNEL_OK")
</pallas_src>

<mosaic_0001>
module attributes {stable_mosaic.version = 11 : i64} {
  func.func @_focal_loss_kernel(%arg0: i32, %arg1: i32, %arg2: memref<5x128xf32, #tpu.memory_space<vmem>>, %arg3: memref<1x128xi32, #tpu.memory_space<vmem>>, %arg4: memref<5x1xf32, #tpu.memory_space<vmem>>, %arg5: memref<1x128xf32, #tpu.memory_space<vmem>>, %arg6: memref<1x128xf32, #tpu.memory_space<vmem>>) attributes {dimension_semantics = [#tpu.dimension_semantics<parallel>, #tpu.dimension_semantics<arbitrary>], iteration_bounds = array<i64: 2, 1>, scalar_prefetch = 0 : i64, scratch_operands = 1 : i64, tpu.core_type = #tpu.core_type<tc>, window_params = [{transform_indices = @transform_0, window_bounds = array<i64: 5, 128>}, {transform_indices = @transform_1, window_bounds = array<i64: 1, 128>}, {pipeline_mode = #tpu.pipeline_mode<synchronous>, transform_indices = @transform_2, window_bounds = array<i64: 5, 1>}, {transform_indices = @transform_3, window_bounds = array<i64: 1, 128>}]} {
    %c0_i32 = arith.constant 0 : i32
    %0 = arith.cmpi eq, %arg1, %c0_i32 : i32
    %1 = arith.extui %0 : i1 to i32
    %c0_i32_0 = arith.constant 0 : i32
    %2 = arith.cmpi ne, %1, %c0_i32_0 : i32
    scf.if %2 {
      %cst_24 = arith.constant 0.000000e+00 : f32
      %54 = vector.broadcast %cst_24 : f32 to vector<1x128xf32>
      %c0_25 = arith.constant 0 : index
      %c0_26 = arith.constant 0 : index
      %55 = vector.load %arg6[%c0_25, %c0_26] : memref<1x128xf32, #tpu.memory_space<vmem>>, vector<1x128xf32>
      tpu.vector_store %arg6[%c0_25, %c0_26], %54 {strides = array<i32>} : memref<1x128xf32, #tpu.memory_space<vmem>>, vector<1x128xf32>,
    } else {
    }
    %c0 = arith.constant 0 : index
    %c0_1 = arith.constant 0 : index
    %3 = vector.load %arg2[%c0, %c0_1] : memref<5x128xf32, #tpu.memory_space<vmem>>, vector<5x128xf32>
    %c0_2 = arith.constant 0 : index
    %c0_3 = arith.constant 0 : index
    %4 = vector.load %arg3[%c0_2, %c0_3] : memref<1x128xi32, #tpu.memory_space<vmem>>, vector<1x128xi32>
    %c0_4 = arith.constant 0 : index
    %c0_5 = arith.constant 0 : index
    %5 = vector.load %arg4[%c0_4, %c0_5] : memref<5x1xf32, #tpu.memory_space<vmem>>, vector<5x1xf32>
    %6 = tpu.iota {dimensions = array<i32: 0>} : vector<5x1xi32>
    %7 = vector.broadcast %6 : vector<5x1xi32> to vector<5x128xi32>
    %8 = vector.broadcast %4 : vector<1x128xi32> to vector<5x128xi32>
    %9 = arith.cmpi eq, %7, %8 : vector<5x128xi32>
    %10 = math.absf %3 : vector<5x128xf32>
    %cst = arith.constant 0.000000e+00 : f32
    %11 = vector.broadcast %cst : f32 to vector<5x128xf32>
    %12 = arith.subf %11, %10 : vector<5x128xf32>
    %13 = math.exp %12 : vector<5x128xf32>
    %cst_6 = arith.constant 0.000000e+00 : f32
    %14 = vector.broadcast %cst_6 : f32 to vector<5x128xf32>
    %15 = arith.maximumf %3, %14 : vector<5x128xf32>
    %cst_7 = arith.constant 0.000000e+00 : f32
    %16 = vector.broadcast %cst_7 : f32 to vector<5x128xf32>
    %17 = arith.select %9, %3, %16 : vector<5x128xi1>, vector<5x128xf32>
    %18 = arith.subf %15, %17 : vector<5x128xf32>
    %19 = math.log1p %13 : vector<5x128xf32>
    %20 = arith.addf %18, %19 : vector<5x128xf32>
    %cst_8 = arith.constant 1.000000e+00 : f32
    %21 = vector.broadcast %cst_8 : f32 to vector<5x128xf32>
    %22 = arith.addf %21, %13 : vector<5x128xf32>
    %cst_9 = arith.constant 1.000000e+00 : f32
    %23 = vector.broadcast %cst_9 : f32 to vector<5x128xf32>
    %24 = arith.divf %23, %22 : vector<5x128xf32>
    %cst_10 = arith.constant 0.000000e+00 : f32
    %25 = vector.broadcast %cst_10 : f32 to vector<5x128xf32>
    %26 = arith.cmpf oge, %3, %25 : vector<5x128xf32>
    %cst_11 = arith.constant 1.000000e+00 : f32
    %27 = vector.broadcast %cst_11 : f32 to vector<5x128xf32>
    %28 = arith.select %26, %27, %13 : vector<5x128xi1>, vector<5x128xf32>
    %29 = arith.mulf %28, %24 : vector<5x128xf32>
    %cst_12 = arith.constant 1.000000e+00 : f32
    %30 = vector.broadcast %cst_12 : f32 to vector<5x128xf32>
    %31 = arith.subf %30, %29 : vector<5x128xf32>
    %32 = arith.select %9, %29, %31 : vector<5x128xi1>, vector<5x128xf32>
    %cst_13 = arith.constant 1.000000e+00 : f32
    %33 = vector.broadcast %cst_13 : f32 to vector<5x128xf32>
    %34 = arith.subf %33, %32 : vector<5x128xf32>
    %cst_14 = arith.constant 1.000000e+00 : f32
    %35 = vector.broadcast %cst_14 : f32 to vector<5x128xf32>
    %36 = arith.mulf %35, %34 : vector<5x128xf32>
    %37 = arith.mulf %36, %34 : vector<5x128xf32>
    %cst_15 = arith.constant 0.000000e+00 : f32
    %38 = vector.shape_cast %5 : vector<5x1xf32> to vector<5x1xf32>
    %39 = vector.broadcast %38 : vector<5x1xf32> to vector<5x128xf32>
    %40 = vector.broadcast %cst_15 : f32 to vector<5x128xf32>
    %41 = arith.select %9, %39, %40 : vector<5x128xi1>, vector<5x128xf32>
    %cst_16 = arith.constant dense<0.000000e+00> : vector<128xf32>
    %42 = vector.multi_reduction <add>, %41, %cst_16 [0] : vector<5x128xf32> to vector<128xf32>
    %43 = vector.shape_cast %42 : vector<128xf32> to vector<1x128xf32>
    %44 = arith.mulf %37, %20 : vector<5x128xf32>
    %cst_17 = arith.constant dense<0.000000e+00> : vector<128xf32>
    %45 = vector.multi_reduction <add>, %44, %cst_17 [0] : vector<5x128xf32> to vector<128xf32>
    %46 = vector.shape_cast %45 : vector<128xf32> to vector<1x128xf32>
    %47 = arith.mulf %43, %46 : vector<1x128xf32>
    %c0_18 = arith.constant 0 : index
    %c0_19 = arith.constant 0 : index
    %48 = vector.load %arg6[%c0_18, %c0_19] : memref<1x128xf32, #tpu.memory_space<vmem>>, vector<1x128xf32>
    %49 = arith.addf %48, %47 : vector<1x128xf32>
    %c0_20 = arith.constant 0 : index
    %c0_21 = arith.constant 0 : index
    %50 = vector.load %arg6[%c0_20, %c0_21] : memref<1x128xf32, #tpu.memory_space<vmem>>, vector<1x128xf32>
    tpu.vector_store %arg6[%c0_20, %c0_21], %49 {strides = array<i32>} : memref<1x128xf32, #tpu.memory_space<vmem>>, vector<1x128xf32>,
    %c0_i32_22 = arith.constant 0 : i32
    %51 = arith.cmpi eq, %arg1, %c0_i32_22 : i32
    %52 = arith.extui %51 : i1 to i32
    %c0_i32_23 = arith.constant 0 : i32
    %53 = arith.cmpi ne, %52, %c0_i32_23 : i32
    scf.if %53 {
      %c0_24 = arith.constant 0 : index
      %c0_25 = arith.constant 0 : index
      %54 = vector.load %arg6[%c0_24, %c0_25] : memref<1x128xf32, #tpu.memory_space<vmem>>, vector<1x128xf32>
      %55 = vector.shape_cast %54 : vector<1x128xf32> to vector<1x1x128xf32>
      %cst_26 = arith.constant dense<0.000000e+00> : vector<1xf32>
      %56 = vector.multi_reduction <add>, %55, %cst_26 [1, 2] : vector<1x1x128xf32> to vector<1xf32>
      %57 = vector.shape_cast %56 : vector<1xf32> to vector<1x1x1xf32>
      %58 = vector.extract %57[0, 0, 0] : f32 from vector<1x1x1xf32>
      %cst_27 = arith.constant 4.000000e+01 : f32
      %59 = arith.divf %58, %cst_27 : f32
      %60 = vector.broadcast %59 : f32 to vector<1x128xf32>
      %c0_28 = arith.constant 0 : index
      %c0_29 = arith.constant 0 : index
      %61 = vector.load %arg5[%c0_28, %c0_29] : memref<1x128xf32, #tpu.memory_space<vmem>>, vector<1x128xf32>
      tpu.vector_store %arg5[%c0_28, %c0_29], %60 {strides = array<i32>} : memref<1x128xf32, #tpu.memory_space<vmem>>, vector<1x128xf32>,
    } else {
    }
    return
  }
  func.func @transform_0(%arg0: i32, %arg1: i32) -> (i32, i32) {
    %c1_i32 = arith.constant 1 : i32
    %0 = arith.muli %arg0, %c1_i32 : i32
    %1 = arith.addi %0, %arg1 : i32
    %c0_i32 = arith.constant 0 : i32
    %c0_i32_0 = arith.constant 0 : i32
    return %c0_i32, %1 : i32, i32
  }
  func.func @transform_1(%arg0: i32, %arg1: i32) -> (i32, i32) {
    %c1_i32 = arith.constant 1 : i32
    %0 = arith.muli %arg0, %c1_i32 : i32
    %1 = arith.addi %0, %arg1 : i32
    %c0_i32 = arith.constant 0 : i32
    %c0_i32_0 = arith.constant 0 : i32
    return %c0_i32, %1 : i32, i32
  }
  func.func @transform_2(%arg0: i32, %arg1: i32) -> (i32, i32) {
    %c0_i32 = arith.constant 0 : i32
    %c0_i32_0 = arith.constant 0 : i32
    %c0_i32_1 = arith.constant 0 : i32
    return %c0_i32, %c0_i32_0 : i32, i32
  }
  func.func @transform_3(%arg0: i32, %arg1: i32) -> (i32, i32) {
    %c0_i32 = arith.constant 0 : i32
    %c0_i32_0 = arith.constant 0 : i32
    return %c0_i32, %arg0 : i32, i32
  }
}

</mosaic_0001>

<llo_original>
// kernel: tpu_custom_call.1
$region0: #{tpu_custom_call.1}
  #allocation0 [shape = 'u32[]', space=smem, size = 0x4, offset = 0x4, fixed_abs, tag = 'smem constant byte address 0x4 - core index']
  #allocation1 [shape = 'u32[144,128]{1,0:T(1,128)}', space=vmem, size = 0x12000, scoped, tag = 'internal scratch']
  #allocation2 [shape = 'f32[1,128]{1,0:T(1,128)}', space=vmem, size = 0x200, scoped, tag = 'scratch operand']
  %s0 = inlined_call_operand.hbm [shape: f32[5,256], index: 0, kind: input, shape index: {}]
  %s1 = inlined_call_operand.vmem [shape: s32[1,256], index: 1, kind: input, shape index: {}]
  %s2 = inlined_call_operand.vmem [shape: f32[5,1], index: 2, kind: input, shape index: {}]
  %s3 = inlined_call_operand.hbm [shape: f32[1,256], index: 3, kind: output, shape index: {}]
  %s4 = sld [smem:[#allocation0]]
  $region57: #{tpu_custom_call.1} parent=0
    _
  %s6 = ssub.s32 1, %s4
  %s7 = scalar_select 0, %s6, %s4
  $region1: #{tpu_custom_call.1} parent=0
    #allocation3 [shape = 'u8[8192]{0}', space=vmem, size = 0x2000, scoped, tag = 'input window, operand 0']
    #allocation4 [shape = 's32[2]{0}', space=sflag, size = 0x8, scoped, tag = 'scoped memory for tpu_custom_call.1']
    #allocation5 [shape = 's32[2]{0}', space=sflag, size = 0x8, scoped, tag = 'scoped memory for tpu_custom_call.1']
    #allocation6 [shape = 'u8[1024]{0}', space=vmem, size = 0x400, scoped, tag = 'output window, operand 0']
    %8 = vsyncpa [#allocation4], 0
    %s9 = scalar_lea.sflag [#allocation4], 1
    %10 = vsyncpa %s9, 0
    %11 = vsyncpa [#allocation5], 0
    %s12 = scalar_lea.sflag [#allocation5], 1
    %13 = vsyncpa %s12, 0
    loop: start=0, step=1, limit=4
    $region2: #{tpu_custom_call.1} parent=1 // loop_pre_header
      _
    $region3: #{tpu_custom_call.1} parent=1 // loop_header
      %s15 = sphi 0, %s19
      %p16 = scmp.ge.s32.totalorder %s15, 4
      %s22 = sphi 0, %s34
      %s23 = sphi 0, %s30
      %s24 = sphi 0, %s22
      %s25 = sphi 0, %s23
      %s26 = sphi 0, %s24
      %s27 = sphi 0, %s25
      %s39 = sphi 0, %s41
      %s42 = sphi 0, %s39
      %s43 = sphi 0, %s42
      %s59 = sphi 0, %s43
      %s67 = sphi 0, %s69
      %s70 = sphi 0, %s67
      %s71 = sphi 0, %s70
      %s87 = sphi 0, %s71
      %s91 = sphi 0, %s91
      %s93 = sphi 0, %s91
      %s94 = sphi 0, %s93
      %s108 = sphi 0, %s94
      %s114 = sphi 0, %s116
      %s117 = sphi 0, %s114
      %s118 = sphi 0, %s117
      %s134 = sphi 0, %s118
    $region4: #{tpu_custom_call.1} parent=1 // loop_header_branch
      %18 = sbr.rel (%p16) target = $region8
    $region5: #{tpu_custom_call.1} parent=1 // loop_body
      %s20 = ssub.s32 %s15, 1
      %s21 = ssub.s32 %s15, 2
      %s28 = sadd.s32 1, %s23
      %p29 = scmp.ge.s32.totalorder %s28, 1
      %s30 = scalar_select %p29, 0, %s28
      %s31 = sadd.s32 1, %s22
      %s32 = scalar_select %p29, %s31, %s22
      %p33 = scmp.ge.s32.totalorder %s32, 2
      %s34 = scalar_select %p33, 0, %s32
      %s35 = sadd.s32 %s22, %s23
      %s36 = sadd.s32 %s34, %s30
      %s37 = ssub.s32 %s35, %s36
      %p38 = scmp.eq.s32.totalorder %s37, 0
      %s40 = sadd.s32 %s39, 1
      %s41 = scalar_select %p38, %s39, %s40
      %p44 = pneg %p38
      %p45 = scmp.eq.s32.totalorder %s15, 1
      %p46 = por %p44, %p45
      %p47 = scmp.ne.s32.totalorder %s39, %s42
      %p48 = scmp.eq.s32.totalorder %s15, 0
      %p49 = por %p47, %p48
      %p50 = scmp.ne.s32.totalorder %s39, %s42
      %p51 = scmp.eq.s32.totalorder %s20, 1
      %p52 = por %p50, %p51
      %p53 = scmp.ne.s32.totalorder %s42, %s43
      %p54 = scmp.eq.s32.totalorder %s20, 0
      %p55 = por %p53, %p54
      %p56 = scmp.ne.s32.totalorder %s42, %s43
      %p57 = scmp.eq.s32.totalorder %s21, 1
      %p58 = por %p56, %p57
      %p60 = scmp.ne.s32.totalorder %s43, %s59
      %p61 = scmp.eq.s32.totalorder %s21, 0
      %p62 = por %p60, %p61
      %s63 = sadd.s32 %s22, %s23
      %s64 = sadd.s32 %s34, %s30
      %s65 = ssub.s32 %s63, %s64
      %p66 = scmp.eq.s32.totalorder %s65, 0
      %s68 = sadd.s32 %s67, 1
      %s69 = scalar_select %p66, %s67, %s68
      %p72 = pneg %p66
      %p73 = scmp.eq.s32.totalorder %s15, 1
      %p74 = por %p72, %p73
      %p75 = scmp.ne.s32.totalorder %s67, %s70
      %p76 = scmp.eq.s32.totalorder %s15, 0
      %p77 = por %p75, %p76
      %p78 = scmp.ne.s32.totalorder %s67, %s70
      %p79 = scmp.eq.s32.totalorder %s20, 1
      %p80 = por %p78, %p79
      %p81 = scmp.ne.s32.totalorder %s70, %s71
      %p82 = scmp.eq.s32.totalorder %s20, 0
      %p83 = por %p81, %p82
      %p84 = scmp.ne.s32.totalorder %s70, %s71
      %p85 = scmp.eq.s32.totalorder %s21, 1
      %p86 = por %p84, %p85
      %p88 = scmp.ne.s32.totalorder %s71, %s87
      %p89 = scmp.eq.s32.totalorder %s21, 0
      %p90 = por %p88, %p89
      %s92 = sadd.s32 %s91, 1
      %p95 = scmp.eq.s32.totalorder %s15, 1
      %p96 = scmp.ne.s32.totalorder %s91, %s93
      %p97 = scmp.eq.s32.totalorder %s15, 0
      %p98 = por %p96, %p97
      %p99 = scmp.ne.s32.totalorder %s91, %s93
      %p100 = scmp.eq.s32.totalorder %s20, 1
      %p101 = por %p99, %p100
      %p102 = scmp.ne.s32.totalorder %s93, %s94
      %p103 = scmp.eq.s32.totalorder %s20, 0
      %p104 = por %p102, %p103
      %p105 = scmp.ne.s32.totalorder %s93, %s94
      %p106 = scmp.eq.s32.totalorder %s21, 1
      %p107 = por %p105, %p106
      %p109 = scmp.ne.s32.totalorder %s94, %s108
      %p110 = scmp.eq.s32.totalorder %s21, 0
      %p111 = por %p109, %p110
      %s112 = ssub.s32 %s22, %s34
      %p113 = scmp.eq.s32.totalorder %s112, 0
      %s115 = sadd.s32 %s114, 1
      %s116 = scalar_select %p113, %s114, %s115
      %p119 = pneg %p113
      %p120 = scmp.eq.s32.totalorder %s15, 1
      %p121 = por %p119, %p120
      %p122 = scmp.ne.s32.totalorder %s114, %s117
      %p123 = scmp.eq.s32.totalorder %s15, 0
      %p124 = por %p122, %p123
      %p125 = scmp.ne.s32.totalorder %s114, %s117
      %p126 = scmp.eq.s32.totalorder %s20, 1
      %p127 = por %p125, %p126
      %p128 = scmp.ne.s32.totalorder %s117, %s118
      %p129 = scmp.eq.s32.totalorder %s20, 0
      %p130 = por %p128, %p129
      %p131 = scmp.ne.s32.totalorder %s117, %s118
      %p132 = scmp.eq.s32.totalorder %s21, 1
      %p133 = por %p131, %p132
      %p135 = scmp.ne.s32.totalorder %s118, %s134
      %p136 = scmp.eq.s32.totalorder %s21, 0
      %p137 = por %p135, %p136
      %p138 = scmp.le.s32.totalorder 1, %s15
      %p139 = scmp.lt.s32.totalorder %s15, 3
      %p140 = pnand %p138, %p139
      %p141 = pneg %p140
      // Predicated region
      $region9: #{tpu_custom_call.1} parent=5 // pred_check
        _
      $region10: #{tpu_custom_call.1} parent=5 // pred_check_branch
        %143 = sbr.rel (%p140) target = $region12
      $region11: #{tpu_custom_call.1} parent=5 // pred_region
        %s144 = ssub.s32 %s15, 1
        // Predicated region
        $region13: #{tpu_custom_call.1} parent=11 // pred_check
          %p145 = pneg %p104
        $region14: #{tpu_custom_call.1} parent=11 // pred_check_branch
          %147 = sbr.rel (%p145) target = $region16
        $region15: #{tpu_custom_call.1} parent=11 // pred_region
          _
        $region16: #{tpu_custom_call.1} parent=11 // pred_fallthru
          _
      $region12: #{tpu_custom_call.1} parent=5 // pred_fallthru
        _
      %p148 = scmp.lt.s32.totalorder %s15, 2
      // Predicated region
      $region17: #{tpu_custom_call.1} parent=5 // pred_check
        %p149 = pneg %p148
      $region18: #{tpu_custom_call.1} parent=5 // pred_check_branch
        %151 = sbr.rel (%p149) target = $region20
      $region19: #{tpu_custom_call.1} parent=5 // pred_region
        // Predicated region
        $region21: #{tpu_custom_call.1} parent=19 // pred_check
          %p152 = pneg %p49
        $region22: #{tpu_custom_call.1} parent=19 // pred_check_branch
          %154 = sbr.rel (%p152) target = $region24
        $region23: #{tpu_custom_call.1} parent=19 // pred_region
          %s155 = sand.u32 %s39, 1
          %s156 = scalar_lea.sflag [#allocation4], %s155
          %s157 = sand.u32 %s39, 1
          %s158 = smul.addr %s157, 8
          %s159 = scalar_lea.vmem [#allocation3], %s158
          %s160 = sadd.s32 %s22, %s23
          %s162 = ssub.s32 128, 128
          %163 = vsyncadd %s156, %s162
          %s164 = smul.addr %s160, 128
          %s165 = scalar_lea.hbm %s0, %s164
          %s167 = sshll.u32 %s159, 4
          %s168 = int_to_ptr.vmem [resolvable:$true] %s167
          %170 = dma.hbm_to_vmem [thread:$0]  %s165, 128, %s168, %s156
        $region24: #{tpu_custom_call.1} parent=19 // pred_fallthru
          _
        // Predicated region
        $region25: #{tpu_custom_call.1} parent=19 // pred_check
          %p171 = pneg %p77
        $region26: #{tpu_custom_call.1} parent=19 // pred_check_branch
          %173 = sbr.rel (%p171) target = $region28
        $region27: #{tpu_custom_call.1} parent=19 // pred_region
          %s174 = sadd.s32 %s22, %s23
          %p175 = scmp.lt.s32.totalorder %s174, 1
          %s176 = scalar_select %p175, %s174, 1
          %s177 = scalar_lea.vmem %s1, %s176
          %s178 = sadd.s32 %s22, %s23
        $region28: #{tpu_custom_call.1} parent=19 // pred_fallthru
          _
      $region20: #{tpu_custom_call.1} parent=5 // pred_fallthru
        _
      %p179 = scmp.le.s32.totalorder 1, %s15
      %p180 = scmp.lt.s32.totalorder %s15, 3
      %p181 = pnand %p179, %p180
      %p182 = pneg %p181
      // Predicated region
      $region29: #{tpu_custom_call.1} parent=5 // pred_check
        _
      $region30: #{tpu_custom_call.1} parent=5 // pred_check_branch
        %184 = sbr.rel (%p181) target = $region32
      $region31: #{tpu_custom_call.1} parent=5 // pred_region
        %s185 = ssub.s32 %s15, 1
        %s186 = sand.u32 %s42, 1
        %s187 = scalar_lea.sflag [#allocation4], %s186
        %s188 = sand.u32 %s42, 1
        %s189 = smul.addr %s188, 8
        %s190 = scalar_lea.vmem [#allocation3], %s189
        // Predicated region
        $region33: #{tpu_custom_call.1} parent=31 // pred_check
          %p191 = pneg %p55
        $region34: #{tpu_custom_call.1} parent=31 // pred_check_branch
          %193 = sbr.rel (%p191) target = $region36
        $region35: #{tpu_custom_call.1} parent=31 // pred_region
          %194 = dma.done %s187, 128
        $region36: #{tpu_custom_call.1} parent=31 // pred_fallthru
          _
        %s195 = sand.u32 %s42, 1
        %s196 = scalar_lea.sflag [#allocation4], %s195
        %s197 = sand.u32 %s42, 1
        %s198 = smul.addr %s197, 8
        %s199 = scalar_lea.vmem [#allocation3], %s198
        %p200 = pneg %p55
        %p201 = pneg %p52
        %s202 = sadd.s32 %s24, %s25
        %p203 = scmp.lt.s32.totalorder %s202, 1
        %s204 = scalar_select %p203, %s202, 1
        %s205 = scalar_lea.vmem %s1, %s204
        %p206 = pneg %p83
        %p207 = pneg %p80
        %p208 = pneg %p104
        %p209 = pneg %p101
        %p210 = pneg %p130
        %p211 = pneg %p127
        %s212 = sand.u32 %s117, 1
        %s213 = scalar_lea.sflag [#allocation5], %s212
        %s214 = sand.u32 %s117, 1
        %s215 = scalar_lea.vmem [#allocation6], %s214
        %s216 = sadd.s32 %s24, %s25
        %s217 = sadd.s32 %s24, %s25
        %p218 = scmp.lt.s32.totalorder %s217, 1
        %s219 = scalar_select %p218, %s217, 1
        %s220 = scalar_lea.vmem %s1, %s219
        %s221 = sadd.s32 %s24, %s25
        %p222 = scmp.eq.s32.totalorder %s25, 0
        // Predicated region
        $region37: #{tpu_custom_call.1} parent=31 // pred_check
          %p223 = pneg %p222
        $region38: #{tpu_custom_call.1} parent=31 // pred_check_branch
          %225 = sbr.rel (%p223) target = $region40
        $region39: #{tpu_custom_call.1} parent=31 // pred_region
          %226 = vst [vmem:[#allocation2] sm:$0x1] 0.0
        $region40: #{tpu_custom_call.1} parent=31 // pred_fallthru
          _
        %v227 = vld [vmem:[%s190] sm:$0x1f]
        %v228 = vld [vmem:[%s220] sm:$0x1]
        %v229 = vld [vmem:[%s2] sm:$0x1f]
        %v230 = vlaneseq
        %v231 = vshrl.u32 %v230, 7
        %v232 = vlaneseq
        %v233 = vshrl.u32 %v232, 7
        %v234 = vsub.s32 0, %v233
        %v235 = vrot.slane %v228, %v234
        %vm236 = vcmp.eq.s32.totalorder %v231, %v235
        %v237 = vand.u32 2147483647, %v227
        %v238 = vsub.f32 0.0, %v237
        %v239 = vmul.f32 %v238, 1.442695
        %v240 = vpow.pop %v239
        %v241 = vmax.f32 %v227, 0.0
        %v242 = vsel %vm236, %v227, 0.0
        %v243 = vsub.f32 %v241, %v242
        %v244 = vadd.f32 %v240, 1.0
        %v245 = vlog2.pop %v244
        %v246 = vmul.f32 %v245, 0.6931472
        %v247 = vmul.f32 -0.5, %v240
        %v248 = vadd.f32 %v247, 1.0
        %v249 = vmul.f32 %v248, %v240
        %v250 = vand.u32 2147483647, %v240
        %vm251 = vcmp.lt.f32.partialorder %v250, 0.0004427343
        %v252 = vsel %vm251, %v249, %v246
        %v253 = vadd.f32 %v243, %v252
        %v254 = vadd.f32 %v240, 1.0
        %v255 = vrcp.pop %v254
        %v256 = vmul.f32 1.0, %v255
        %vm257 = vcmp.ge.f32.partialorder %v227, 0.0
        %v258 = vsel %vm257, 1.0, %v240
        %v259 = vmul.f32 %v258, %v256
        %v260 = vsub.f32 1.0, %v259
        %v261 = vsel %vm236, %v259, %v260
        %v262 = vsub.f32 1.0, %v261
        %v263 = vmul.f32 %v262, %v262
        %265 = vset.pattern.permute.xlu0 0
        %266 = vperm.xlu0 %265, %v229
        %v267 = vpop.permute.xlu0 %266
        %v269 = vsel %vm236, %v267, 0.0
        %vm270 = vcmask 1044480
        %v271 = vsel %vm270, %v269, 0.0
        %v272 = vrot.slane %v271, 4
        %v273 = vadd.f32 %v271, %v272
        %v274 = vrot.slane %v273, 2
        %v275 = vadd.f32 %v273, %v274
        %v276 = vrot.slane %v275, 1
        %v277 = vadd.f32 %v275, %v276
        %v278 = vmul.f32 %v263, %v253
        %v279 = vsel %vm270, %v278, 0.0
        %v280 = vrot.slane %v279, 4
        %v281 = vadd.f32 %v279, %v280
        %v282 = vrot.slane %v281, 2
        %v283 = vadd.f32 %v281, %v282
        %v284 = vrot.slane %v283, 1
        %v285 = vadd.f32 %v283, %v284
        %v286 = vmul.f32 %v277, %v285
        %v287 = vld [vmem:[#allocation2] sm:$0x1]
        %v288 = vadd.f32 %v287, %v286
        %289 = vst [vmem:[#allocation2] sm:$0x1] %v288
        // Predicated region
        $region41: #{tpu_custom_call.1} parent=31 // pred_check
          %p290 = pneg %p222
        $region42: #{tpu_custom_call.1} parent=31 // pred_check_branch
          %292 = sbr.rel (%p290) target = $region44
        $region43: #{tpu_custom_call.1} parent=31 // pred_region
          %v293 = vld [vmem:[#allocation2] sm:$0x1]
          %vm294 = vcmask 1040384
          %v295 = vsel %vm294, %v293, 0.0
          %296 = vadd.xlane.f32.xlu0 %v295
          %v297 = vpop.xlane.xlu0 %296
          %v298 = vrot.slane %v297, 4
          %v299 = vadd.f32 %v297, %v298
          %v300 = vrot.slane %v299, 2
          %v301 = vadd.f32 %v299, %v300
          %v302 = vrot.slane %v301, 1
          %v303 = vadd.f32 %v301, %v302
          %s304 = vtos %v303
          %v305 = vrcp.pop 40.0
          %s306 = vtos %v305
          %s307 = smul.f32 %s304, %s306
          %v308 = vstv %s307
          %309 = vst [vmem:[%s215] sm:$0x1] %v308
        $region44: #{tpu_custom_call.1} parent=31 // pred_fallthru
          _
        %s310 = sand.u32 %s117, 1
        %s311 = scalar_lea.sflag [#allocation5], %s310
        %s312 = sand.u32 %s117, 1
        %s313 = scalar_lea.vmem [#allocation6], %s312
        // Predicated region
        $region45: #{tpu_custom_call.1} parent=31 // pred_check
          %p314 = pneg %p127
        $region46: #{tpu_custom_call.1} parent=31 // pred_check_branch
          %316 = sbr.rel (%p314) target = $region48
        $region47: #{tpu_custom_call.1} parent=31 // pred_region
          %s318 = ssub.s32 16, 16
          %319 = vsyncadd %s311, %s318
          %s320 = smul.addr %s24, 16
          %s321 = scalar_lea.hbm %s3, %s320
          %s323 = sshll.u32 %s313, 4
          %s324 = int_to_ptr.vmem [resolvable:$true] %s323
          %326 = dma.vmem_to_hbm [thread:$0]  %s324, 16, %s321, %s311
        $region48: #{tpu_custom_call.1} parent=31 // pred_fallthru
          _
      $region32: #{tpu_custom_call.1} parent=5 // pred_fallthru
        _
      %p327 = scmp.le.s32.totalorder 2, %s15
      // Predicated region
      $region49: #{tpu_custom_call.1} parent=5 // pred_check
        %p328 = pneg %p327
      $region50: #{tpu_custom_call.1} parent=5 // pred_check_branch
        %330 = sbr.rel (%p328) target = $region52
      $region51: #{tpu_custom_call.1} parent=5 // pred_region
        %s331 = ssub.s32 %s15, 2
        // Predicated region
        $region53: #{tpu_custom_call.1} parent=51 // pred_check
          %p332 = pneg %p133
        $region54: #{tpu_custom_call.1} parent=51 // pred_check_branch
          %334 = sbr.rel (%p332) target = $region56
        $region55: #{tpu_custom_call.1} parent=51 // pred_region
          %s335 = sand.u32 %s118, 1
          %s336 = scalar_lea.sflag [#allocation5], %s335
          %s337 = sand.u32 %s118, 1
          %s338 = scalar_lea.vmem [#allocation6], %s337
          %339 = dma.done %s336, 16
        $region56: #{tpu_custom_call.1} parent=51 // pred_fallthru
          _
      $region52: #{tpu_custom_call.1} parent=5 // pred_fallthru
        _
    $region6: #{tpu_custom_call.1} parent=1 // loop_footer
      %s19 = sadd.s32 1, %s15
    $region7: #{tpu_custom_call.1} parent=1 // loop_footer_branch
      %14 = sbr.rel target = $region3
    $region8: #{tpu_custom_call.1} parent=1 // loop_exit
      _
    %340 = vsyncpa [#allocation4], 1
    %s341 = scalar_lea.sflag [#allocation4], 1
    %342 = vsyncpa %s341, 1
    %343 = vsyncpa [#allocation5], 1
    %s344 = scalar_lea.sflag [#allocation5], 1
    %345 = vsyncpa %s344, 1

</llo_original>
